<compile_context>
chip_gen: v5e
topology: v5e:2x2
jax: 0.10.0
libtpu: 0.0.40
codegen_flags: <defaults>
</compile_context>

<pallas_src>
import math

import jax
import jax.numpy as jnp
from jax.experimental import pallas as pl
from jax.experimental.pallas import tpu as pltpu

_MiB = 1024 * 1024


def _round_up(x: int, m: int) -> int:
    return ((x + m - 1) // m) * m


def _pad2d(a, rows, cols):
    r, c = a.shape
    if r == rows and c == cols:
        return a
    return jnp.pad(a, ((0, rows - r), (0, cols - c)))


def _vmem_capacity_bytes() -> int:
    """Physical per-core VMEM (generation-aware), conservative fallback."""
    try:
        return int(pltpu.get_tpu_info().vmem_capacity_bytes)
    except Exception:  # introspection-only probe; never wraps the kernel run
        return 64 * _MiB


def _mlp_kernel(x_ref, w1_ref, b1_ref, w2_ref, b2_ref, o_ref, acc_ref):
    """One (M, N, hid) grid step of relu(x @ W1 + b1) @ W2 + b2."""
    k = pl.program_id(2)

    @pl.when(k == 0)
    def _init():
        acc_ref[...] = jnp.zeros_like(acc_ref)

    # fc1 for this hid slice: MXU matmul with f32 accumulation; bias + ReLU f32.
    h = jnp.dot(x_ref[...], w1_ref[...], preferred_element_type=jnp.float32)
    h = jnp.maximum(h + b1_ref[...], 0.0)

    # Partial fc2, accumulated into the f32 VMEM scratch.
    acc_ref[...] += jnp.dot(h.astype(w2_ref.dtype), w2_ref[...],
                            preferred_element_type=jnp.float32)

    @pl.when(k == pl.num_programs(2) - 1)
    def _finalize():
        o_ref[...] = (acc_ref[...] + b2_ref[...]).astype(o_ref.dtype)


def mlp_forward(x, w1, b1, w2, b2, *, mxu_dtype="auto",
                block_m=None, block_h=None, block_n=None):
    """Fused MLP forward.

    x:  [..., in_ch]
    w1: [in_ch, hid]   (transpose of torch fc1.weight)
    b1: [hid]
    w2: [hid, out_ch]  (transpose of torch fc2.weight)
    b2: [out_ch]
    mxu_dtype: "auto" (default) casts x/W1/W2 to bfloat16 on the MXU when the
      input is float32 (accumulation, bias add and ReLU stay f32).  Pass
      jnp.float32 or None to keep the full-precision MXU path.
    """
    orig_shape = x.shape
    in_ch = orig_shape[-1]
    hid = w1.shape[1]
    out_ch = w2.shape[1]
    out_dtype = x.dtype

    x2d = x.reshape(-1, in_ch)
    n = x2d.shape[0]

    # ---- compute (MXU) dtype ------------------------------------------------
    if isinstance(mxu_dtype, str) and mxu_dtype == "auto":
        compute_dtype = (jnp.dtype(jnp.bfloat16)
                         if jnp.dtype(x.dtype) == jnp.dtype(jnp.float32)
                         else jnp.dtype(x.dtype))
    elif mxu_dtype is None:
        compute_dtype = jnp.dtype(x.dtype)
    else:
        compute_dtype = jnp.dtype(mxu_dtype)

    bpe = compute_dtype.itemsize
    out_bpe = jnp.dtype(out_dtype).itemsize
    sub = 8 if bpe >= 4 else 16          # sublane alignment for compute dtype

    # ---- generation-aware VMEM budget --------------------------------------
    vmem_cap = _vmem_capacity_bytes()
    vmem_budget_total = int(vmem_cap * 0.8)   # cap handed to the compiler
    internal_margin = 8 * _MiB                # Mosaic internal scratch / spills
    tile_budget = max(vmem_budget_total - internal_margin, 8 * _MiB)

    def vmem_tile(rows, cols, itemsize, sub_align):
        # Physical VMEM occupancy of one (rows, cols) tile.
        return (_round_up(max(rows, 1), sub_align)
                * _round_up(max(cols, 1), 128) * itemsize)

    def tile_bytes(bm, bh, bn):
        return (
            2 * vmem_tile(bm, in_ch, bpe, sub)     # x (double buffered)
            + 2 * vmem_tile(in_ch, bh, bpe, sub)   # W1
            + 2 * vmem_tile(1, bh, 4, 8)           # b1 (f32, 8-sublane padded)
            + 2 * vmem_tile(bh, bn, bpe, sub)      # W2
            + 2 * vmem_tile(1, bn, 4, 8)           # b2
            + 2 * vmem_tile(bm, bn, out_bpe, sub)  # output tile
            + vmem_tile(bm, bn, 4, 8)              # f32 accumulator scratch
            + vmem_tile(bm, bh, 4, 8)              # fc1 intermediate h (f32)
            + vmem_tile(bm, bh, bpe, sub)          # h cast for the fc2 matmul
        )

    # ---- tile selection (VMEM-budget driven) --------------------------------
    hid_p128 = _round_up(hid, 128)
    out_p128 = _round_up(out_ch, 128)

    bm_target = block_m if block_m is not None else \
        (512 if vmem_cap >= 100 * _MiB else 256)   # v5e/v6e vs v7x
    bm = max(sub, min(_round_up(bm_target, sub), _round_up(n, sub)))

    bn = out_p128 if block_n is None else \
        max(128, min(_round_up(block_n, 128), out_p128))
    # Prefer full hid residency (k_tiles == 1): weights DMA'd once per call,
    # accumulator never re-read across k steps.
    bh = hid_p128 if block_h is None else \
        max(128, min(_round_up(block_h, 128), hid_p128))

    # Shrink whichever of (hid tile, out tile) is larger, then the M tile,
    # until the footprint fits the budget.
    while tile_bytes(bm, bh, bn) > tile_budget:
        if bh >= bn and bh > 128:
            bh = max(128, _round_up(bh // 2, 128))
        elif bn > 128:
            bn = max(128, _round_up(bn // 2, 128))
        elif bm > sub:
            bm = max(sub, _round_up(bm // 2, sub))
        else:
            break

    hid_p = _round_up(hid, bh)
    out_p = _round_up(out_ch, bn)
    n_p = _round_up(n, bm)
    m_tiles = n_p // bm
    n_tiles = out_p // bn
    k_tiles = hid_p // bh

    # ---- pad + cast operands (zero padding keeps results exact) -------------
    xp = _pad2d(x2d, n_p, in_ch).astype(compute_dtype)
    w1p = _pad2d(w1, in_ch, hid_p).astype(compute_dtype)
    w2p = _pad2d(w2, hid_p, out_p).astype(compute_dtype)
    b1p = jnp.pad(b1.astype(jnp.float32), (0, hid_p - hid)).reshape(1, hid_p)
    b2p = jnp.pad(b2.astype(jnp.float32),
                  (0, out_p - out_ch)).reshape(1, out_p)

    # ---- cost estimate (includes weight re-streaming when k_tiles > 1) ------
    flops = 2 * n_p * in_ch * hid_p * n_tiles + 2 * n_p * hid_p * out_p
    w1_fetches = 1 if k_tiles == 1 else m_tiles * n_tiles
    w2_fetches = 1 if (k_tiles == 1 and n_tiles == 1) else m_tiles
    bytes_accessed = (n_p * in_ch * bpe
                      + w1_fetches * in_ch * hid_p * bpe
                      + w2_fetches * hid_p * out_p * bpe
                      + hid_p * 4 + out_p * 4
                      + n_p * out_p * out_bpe)

    vmem_limit = int(max(16 * _MiB,
                         min(vmem_budget_total,
                             tile_bytes(bm, bh, bn) + internal_margin)))

    y_p = pl.pallas_call(
        _mlp_kernel,
        out_shape=jax.ShapeDtypeStruct((n_p, out_p), out_dtype),
        grid_spec=pltpu.PrefetchScalarGridSpec(
            num_scalar_prefetch=0,
            grid=(m_tiles, n_tiles, k_tiles),
            in_specs=[
                # x tile: resident across the hid reduction and out axes.
                pl.BlockSpec((bm, in_ch), lambda i, j, k: (i, 0)),
                # W1 / b1 hid-slice.
                pl.BlockSpec((in_ch, bh), lambda i, j, k: (0, k)),
                pl.BlockSpec((1, bh), lambda i, j, k: (0, k)),
                # W2 (hid-slice, out-slice) and b2 (out-slice).
                pl.BlockSpec((bh, bn), lambda i, j, k: (k, j)),
                pl.BlockSpec((1, bn), lambda i, j, k: (0, j)),
            ],
            out_specs=pl.BlockSpec((bm, bn), lambda i, j, k: (i, j)),
            scratch_shapes=[pltpu.VMEM((bm, bn), jnp.float32)],
        ),
        compiler_params=pltpu.CompilerParams(
            dimension_semantics=("parallel", "parallel", "arbitrary"),
            vmem_limit_bytes=vmem_limit,
        ),
        cost_estimate=pl.CostEstimate(
            flops=flops, transcendentals=0, bytes_accessed=bytes_accessed),
    )(xp, w1p, b1p, w2p, b2p)

    y = y_p[:n, :out_ch]
    return y.reshape(orig_shape[:-1] + (out_ch,))


def xavier_uniform(key, fan_in, fan_out, dtype=jnp.float32):
    # Matches torch.nn.init.xavier_uniform_ (gain=1). PyTorch weight is
    # [out, in]; we generate [in, out] directly (distribution identical).
    bound = math.sqrt(6.0 / (fan_in + fan_out))
    return jax.random.uniform(key, (fan_in, fan_out), dtype=dtype,
                              minval=-bound, maxval=bound)


if __name__ == "__main__":
    in_ch, hid_ch, out_ch = 32, 64, 16
    batch = 8

    key = jax.random.PRNGKey(0)
    kx, kw1, kw2 = jax.random.split(key, 3)

    x = jax.random.normal(kx, (batch, in_ch), dtype=jnp.float32)
    w1 = xavier_uniform(kw1, in_ch, hid_ch)          # [in, hid]
    b1 = jnp.zeros((hid_ch,), dtype=jnp.float32)
    w2 = xavier_uniform(kw2, hid_ch, out_ch)         # [hid, out]
    b2 = jnp.zeros((out_ch,), dtype=jnp.float32)

    # Pure-JAX reference.
    ref = jnp.maximum(x @ w1 + b1, 0.0) @ w2 + b2

    # Exact f32 MXU path.
    y32 = jax.block_until_ready(
        mlp_forward(x, w1, b1, w2, b2, mxu_dtype=jnp.float32))
    assert y32.shape == (batch, out_ch)
    assert jnp.allclose(y32, ref, atol=1e-5, rtol=1e-5), \
        float(jnp.max(jnp.abs(y32 - ref)))

    # Default path: bf16 MXU with f32 accumulation (looser tolerance).
    ybf = jax.block_until_ready(mlp_forward(x, w1, b1, w2, b2))
    assert ybf.shape == (batch, out_ch)
    assert jnp.allclose(ybf, ref, atol=5e-2, rtol=5e-2), \
        float(jnp.max(jnp.abs(ybf - ref)))

    print("KERNEL_OK")
</pallas_src>

<mosaic_0001>
module attributes {stable_mosaic.version = 11 : i64} {
  func.func @_mlp_kernel(%arg0: i32, %arg1: i32, %arg2: i32, %arg3: memref<8x32xf32, #tpu.memory_space<vmem>>, %arg4: memref<32x128xf32, #tpu.memory_space<vmem>>, %arg5: memref<1x128xf32, #tpu.memory_space<vmem>>, %arg6: memref<128x128xf32, #tpu.memory_space<vmem>>, %arg7: memref<1x128xf32, #tpu.memory_space<vmem>>, %arg8: memref<8x128xf32, #tpu.memory_space<vmem>>, %arg9: memref<8x128xf32, #tpu.memory_space<vmem>>) attributes {dimension_semantics = [#tpu.dimension_semantics<parallel>, #tpu.dimension_semantics<parallel>, #tpu.dimension_semantics<arbitrary>], iteration_bounds = array<i64: 1, 1, 1>, scalar_prefetch = 0 : i64, scratch_operands = 1 : i64, tpu.core_type = #tpu.core_type<tc>, window_params = [{transform_indices = @transform_0, window_bounds = array<i64: 8, 32>}, {transform_indices = @transform_1, window_bounds = array<i64: 32, 128>}, {transform_indices = @transform_2, window_bounds = array<i64: 1, 128>}, {transform_indices = @transform_3, window_bounds = array<i64: 128, 128>}, {transform_indices = @transform_4, window_bounds = array<i64: 1, 128>}, {transform_indices = @transform_5, window_bounds = array<i64: 8, 128>}]} {
    %c0_i32 = arith.constant 0 : i32
    %0 = arith.cmpi eq, %arg2, %c0_i32 : i32
    %1 = arith.extui %0 : i1 to i32
    %c0_i32_0 = arith.constant 0 : i32
    %2 = arith.cmpi ne, %1, %c0_i32_0 : i32
    scf.if %2 {
      %cst_16 = arith.constant 0.000000e+00 : f32
      %19 = vector.broadcast %cst_16 : f32 to vector<8x128xf32>
      %c0_17 = arith.constant 0 : index
      %c0_18 = arith.constant 0 : index
      %20 = vector.load %arg9[%c0_17, %c0_18] : memref<8x128xf32, #tpu.memory_space<vmem>>, vector<8x128xf32>
      tpu.vector_store %arg9[%c0_17, %c0_18], %19 {strides = array<i32>} : memref<8x128xf32, #tpu.memory_space<vmem>>, vector<8x128xf32>,
    } else {
    }
    %c0 = arith.constant 0 : index
    %c0_1 = arith.constant 0 : index
    %3 = vector.load %arg3[%c0, %c0_1] : memref<8x32xf32, #tpu.memory_space<vmem>>, vector<8x32xf32>
    %c0_2 = arith.constant 0 : index
    %c0_3 = arith.constant 0 : index
    %4 = vector.load %arg4[%c0_2, %c0_3] : memref<32x128xf32, #tpu.memory_space<vmem>>, vector<32x128xf32>
    %cst = arith.constant dense<0.000000e+00> : vector<8x128xf32>
    %5 = tpu.matmul %3, %4, %cst {dimension_numbers = #tpu.dot_dimension_numbers<[1], [0], [0], [1], [0, 0, 1, 1], [], []>} : vector<8x32xf32>, vector<32x128xf32>, vector<8x128xf32> -> vector<8x128xf32>
    %c0_4 = arith.constant 0 : index
    %c0_5 = arith.constant 0 : index
    %6 = vector.load %arg5[%c0_4, %c0_5] : memref<1x128xf32, #tpu.memory_space<vmem>>, vector<1x128xf32>
    %7 = vector.broadcast %6 : vector<1x128xf32> to vector<8x128xf32>
    %8 = arith.addf %5, %7 : vector<8x128xf32>
    %cst_6 = arith.constant 0.000000e+00 : f32
    %9 = vector.broadcast %cst_6 : f32 to vector<8x128xf32>
    %10 = arith.maximumf %8, %9 : vector<8x128xf32>
    %c0_7 = arith.constant 0 : index
    %c0_8 = arith.constant 0 : index
    %11 = vector.load %arg9[%c0_7, %c0_8] : memref<8x128xf32, #tpu.memory_space<vmem>>, vector<8x128xf32>
    %c0_9 = arith.constant 0 : index
    %c0_10 = arith.constant 0 : index
    %12 = vector.load %arg6[%c0_9, %c0_10] : memref<128x128xf32, #tpu.memory_space<vmem>>, vector<128x128xf32>
    %cst_11 = arith.constant dense<0.000000e+00> : vector<8x128xf32>
    %13 = tpu.matmul %10, %12, %cst_11 {dimension_numbers = #tpu.dot_dimension_numbers<[1], [0], [0], [1], [0, 0, 1, 1], [], []>} : vector<8x128xf32>, vector<128x128xf32>, vector<8x128xf32> -> vector<8x128xf32>
    %14 = arith.addf %11, %13 : vector<8x128xf32>
    %c0_12 = arith.constant 0 : index
    %c0_13 = arith.constant 0 : index
    %15 = vector.load %arg9[%c0_12, %c0_13] : memref<8x128xf32, #tpu.memory_space<vmem>>, vector<8x128xf32>
    tpu.vector_store %arg9[%c0_12, %c0_13], %14 {strides = array<i32>} : memref<8x128xf32, #tpu.memory_space<vmem>>, vector<8x128xf32>,
    %c0_i32_14 = arith.constant 0 : i32
    %16 = arith.cmpi eq, %arg2, %c0_i32_14 : i32
    %17 = arith.extui %16 : i1 to i32
    %c0_i32_15 = arith.constant 0 : i32
    %18 = arith.cmpi ne, %17, %c0_i32_15 : i32
    scf.if %18 {
      %c0_16 = arith.constant 0 : index
      %c0_17 = arith.constant 0 : index
      %19 = vector.load %arg9[%c0_16, %c0_17] : memref<8x128xf32, #tpu.memory_space<vmem>>, vector<8x128xf32>
      %c0_18 = arith.constant 0 : index
      %c0_19 = arith.constant 0 : index
      %20 = vector.load %arg7[%c0_18, %c0_19] : memref<1x128xf32, #tpu.memory_space<vmem>>, vector<1x128xf32>
      %21 = vector.broadcast %20 : vector<1x128xf32> to vector<8x128xf32>
      %22 = arith.addf %19, %21 : vector<8x128xf32>
      %c0_20 = arith.constant 0 : index
      %c0_21 = arith.constant 0 : index
      %23 = vector.load %arg8[%c0_20, %c0_21] : memref<8x128xf32, #tpu.memory_space<vmem>>, vector<8x128xf32>
      tpu.vector_store %arg8[%c0_20, %c0_21], %22 {strides = array<i32>} : memref<8x128xf32, #tpu.memory_space<vmem>>, vector<8x128xf32>,
    } else {
    }
    return
  }
  func.func @transform_0(%arg0: i32, %arg1: i32, %arg2: i32) -> (i32, i32) {
    %c0_i32 = arith.constant 0 : i32
    %c0_i32_0 = arith.constant 0 : i32
    return %arg0, %c0_i32 : i32, i32
  }
  func.func @transform_1(%arg0: i32, %arg1: i32, %arg2: i32) -> (i32, i32) {
    %c0_i32 = arith.constant 0 : i32
    %c0_i32_0 = arith.constant 0 : i32
    return %c0_i32, %arg2 : i32, i32
  }
  func.func @transform_2(%arg0: i32, %arg1: i32, %arg2: i32) -> (i32, i32) {
    %c0_i32 = arith.constant 0 : i32
    %c0_i32_0 = arith.constant 0 : i32
    return %c0_i32, %arg2 : i32, i32
  }
  func.func @transform_3(%arg0: i32, %arg1: i32, %arg2: i32) -> (i32, i32) {
    %c0_i32 = arith.constant 0 : i32
    return %arg2, %arg1 : i32, i32
  }
  func.func @transform_4(%arg0: i32, %arg1: i32, %arg2: i32) -> (i32, i32) {
    %c0_i32 = arith.constant 0 : i32
    %c0_i32_0 = arith.constant 0 : i32
    return %c0_i32, %arg1 : i32, i32
  }
  func.func @transform_5(%arg0: i32, %arg1: i32, %arg2: i32) -> (i32, i32) {
    %c0_i32 = arith.constant 0 : i32
    return %arg0, %arg1 : i32, i32
  }
}

</mosaic_0001>

<llo_original>
// kernel: tpu_custom_call.1
$region0: #{tpu_custom_call.1}
  #allocation0 [shape = 'u32[]', space=smem, size = 0x4, offset = 0x4, fixed_abs, tag = 'smem constant byte address 0x4 - core index']
  #allocation1 [shape = 'u32[72,128]{1,0:T(1,128)}', space=vmem, size = 0x9000, scoped, tag = 'internal scratch']
  #allocation2 [shape = 'f32[8,128]{1,0:T(8,128)}', space=vmem, size = 0x1000, scoped, tag = 'scratch operand']
  %s0 = inlined_call_operand.hbm [shape: f32[8,32], index: 0, kind: input, shape index: {}]
  %s1 = inlined_call_operand.hbm [shape: f32[32,128], index: 1, kind: input, shape index: {}]
  %s2 = inlined_call_operand.vmem [shape: f32[1,128], index: 2, kind: input, shape index: {}]
  %s3 = inlined_call_operand.hbm [shape: f32[128,128], index: 3, kind: input, shape index: {}]
  %s4 = inlined_call_operand.vmem [shape: f32[1,128], index: 4, kind: input, shape index: {}]
  %s5 = inlined_call_operand.hbm [shape: f32[8,128], index: 5, kind: output, shape index: {}]
  %s6 = sld [smem:[#allocation0]]
  $region50: #{tpu_custom_call.1} parent=0
    _
  %s8 = ssub.s32 1, %s6
  %s9 = scalar_select 0, %s8, %s6
  $region1: #{tpu_custom_call.1} parent=0
    #allocation3 [shape = 'u8[4096]{0}', space=vmem, size = 0x1000, scoped, tag = 'input window, operand 0, single buffered']
    #allocation4 [shape = 's32[1]{0}', space=sflag, size = 0x4, scoped, tag = 'scoped memory for tpu_custom_call.1']
    #allocation5 [shape = 's32[1]{0}', space=sflag, size = 0x4, scoped, tag = 'scoped memory for tpu_custom_call.1']
    #allocation6 [shape = 'u8[16384]{0}', space=vmem, size = 0x4000, scoped, tag = 'input window, operand 1, single buffered']
    #allocation7 [shape = 's32[1]{0}', space=sflag, size = 0x4, scoped, tag = 'scoped memory for tpu_custom_call.1']
    #allocation8 [shape = 'u8[65536]{0}', space=vmem, size = 0x10000, scoped, tag = 'input window, operand 3, single buffered']
    #allocation9 [shape = 'u8[4096]{0}', space=vmem, size = 0x1000, scoped, tag = 'output window, operand 0, single buffered']
    %10 = vsyncpa [#allocation4], 0
    %11 = vsyncpa [#allocation7], 0
    %12 = vsyncpa [#allocation5], 0
    // Predicated region
    $region2: #{tpu_custom_call.1} parent=1 // pred_check
      _
    $region3: #{tpu_custom_call.1} parent=1 // pred_check_branch
      %14 = sbr.rel (0) target = $region5
    $region4: #{tpu_custom_call.1} parent=1 // pred_region
      %16 = vsyncadd [#allocation4], 0
      %s18 = sshll.u32 %s0, 4
      %s19 = int_to_ptr.hbm [resolvable:$true] %s18
      %s20 = sshll.u32 [#allocation3], 4
      %s21 = int_to_ptr.vmem [resolvable:$true] %s20
      %23 = dma.hbm_to_vmem [thread:$0]  %s19, 128, %s21, [#allocation4]
    $region5: #{tpu_custom_call.1} parent=1 // pred_fallthru
      _
    // Predicated region
    $region6: #{tpu_custom_call.1} parent=1 // pred_check
      _
    $region7: #{tpu_custom_call.1} parent=1 // pred_check_branch
      %25 = sbr.rel (0) target = $region9
    $region8: #{tpu_custom_call.1} parent=1 // pred_region
      %27 = vsyncadd [#allocation7], 0
      %s28 = sshll.u32 %s1, 4
      %s29 = int_to_ptr.hbm [resolvable:$true] %s28
      %s30 = sshll.u32 [#allocation6], 4
      %s31 = int_to_ptr.vmem [resolvable:$true] %s30
      %36 = dma.hbm_to_vmem [thread:$0]  %s29, 512, %s31, [#allocation7], 128, 128, 8
    $region9: #{tpu_custom_call.1} parent=1 // pred_fallthru
      _
    // Predicated region
    $region10: #{tpu_custom_call.1} parent=1 // pred_check
      _
    $region11: #{tpu_custom_call.1} parent=1 // pred_check_branch
      %38 = sbr.rel (0) target = $region13
    $region12: #{tpu_custom_call.1} parent=1 // pred_region
      _
    $region13: #{tpu_custom_call.1} parent=1 // pred_fallthru
      _
    // Predicated region
    $region14: #{tpu_custom_call.1} parent=1 // pred_check
      _
    $region15: #{tpu_custom_call.1} parent=1 // pred_check_branch
      %40 = sbr.rel (0) target = $region17
    $region16: #{tpu_custom_call.1} parent=1 // pred_region
      %42 = vsyncadd [#allocation7], 0
      %s43 = sshll.u32 %s3, 4
      %s44 = int_to_ptr.hbm [resolvable:$true] %s43
      %s45 = sshll.u32 [#allocation8], 4
      %s46 = int_to_ptr.vmem [resolvable:$true] %s45
      %51 = dma.hbm_to_vmem [thread:$0]  %s44, 2048, %s46, [#allocation7], 128, 128, 8
    $region17: #{tpu_custom_call.1} parent=1 // pred_fallthru
      _
    // Predicated region
    $region18: #{tpu_custom_call.1} parent=1 // pred_check
      _
    $region19: #{tpu_custom_call.1} parent=1 // pred_check_branch
      %53 = sbr.rel (0) target = $region21
    $region20: #{tpu_custom_call.1} parent=1 // pred_region
      _
    $region21: #{tpu_custom_call.1} parent=1 // pred_fallthru
      _
    // Predicated region
    $region22: #{tpu_custom_call.1} parent=1 // pred_check
      _
    $region23: #{tpu_custom_call.1} parent=1 // pred_check_branch
      %55 = sbr.rel (0) target = $region25
    $region24: #{tpu_custom_call.1} parent=1 // pred_region
      %57 = dma.done [#allocation4], 128
    $region25: #{tpu_custom_call.1} parent=1 // pred_fallthru
      _
    // Predicated region
    $region26: #{tpu_custom_call.1} parent=1 // pred_check
      _
    $region27: #{tpu_custom_call.1} parent=1 // pred_check_branch
      %59 = sbr.rel (0) target = $region29
    $region28: #{tpu_custom_call.1} parent=1 // pred_region
      %61 = dma.done [#allocation7], 512
    $region29: #{tpu_custom_call.1} parent=1 // pred_fallthru
      _
    // Predicated region
    $region30: #{tpu_custom_call.1} parent=1 // pred_check
      _
    $region31: #{tpu_custom_call.1} parent=1 // pred_check_branch
      %63 = sbr.rel (0) target = $region33
    $region32: #{tpu_custom_call.1} parent=1 // pred_region
      %65 = dma.done [#allocation7], 2048
    $region33: #{tpu_custom_call.1} parent=1 // pred_fallthru
      _
    %p66 = scmp.eq.s32.totalorder 0, 0
    // Predicated region
    $region34: #{tpu_custom_call.1} parent=1 // pred_check
      %p67 = pneg %p66
    $region35: #{tpu_custom_call.1} parent=1 // pred_check_branch
      %69 = sbr.rel (%p67) target = $region37
    $region36: #{tpu_custom_call.1} parent=1 // pred_region
      %70 = vst [vmem:[#allocation2] sm:$0xff] 0.0
    $region37: #{tpu_custom_call.1} parent=1 // pred_fallthru
      _
    %v71 = vld [vmem:[#allocation3] sm:$0xff]
    %v72 = vld [vmem:[#allocation6] sm:$0xff]
    %v73 = vld [vmem:[#allocation6 + $0x8] sm:$0xff]
    %v74 = vld [vmem:[#allocation6 + $0x10] sm:$0xff]
    %v75 = vld [vmem:[#allocation6 + $0x18] sm:$0xff]
    %v76 = vld [vmem:[%s2] sm:$0x1]
    %v78 = vperm.slane %v76, 0
    %vm80 = vcmask 261120
    %v82 = vsel %vm80, %v71, 0
    %84 = vmatpush.msra.mxu0 0.0
    %85 = vmatpush.msra.mxu0 0.0
    %86 = vmatpush.msra.mxu0 0.0
    %87 = vmatpush.msra.mxu0 0.0
    %88 = vmatpush.msra.mxu0 0.0
    %89 = vmatpush.msra.mxu0 0.0
    %90 = vmatpush.msra.mxu0 0.0
    %91 = vmatpush.msra.mxu0 0.0
    %92 = vmatpush.msra.mxu0 0.0
    %93 = vmatpush.msra.mxu0 0.0
    %94 = vmatpush.msra.mxu0 0.0
    %95 = vmatpush.msra.mxu0 0.0
    %96 = vmatpush.msra.mxu0 %v75
    %97 = vmatpush.msra.mxu0 %v74
    %98 = vmatpush.msra.mxu0 %v73
    %99 = vmatpush.msra.mxu0 %v72
    %100 = vmatmul.f32.gmra.mxu0 %v82
    %v101 = vpop.f32.mrf.mxu0
    %v102 = vadd.f32 %v78, %v101
    %103 = vdwg.mxu0
    %v104 = vmax.f32 %v102, 0.0
    %v105 = vld [vmem:[#allocation2] sm:$0xff]
    %v106 = vld [vmem:[#allocation8] sm:$0xff]
    %v107 = vld [vmem:[#allocation8 + $0x8] sm:$0xff]
    %v108 = vld [vmem:[#allocation8 + $0x10] sm:$0xff]
    %v109 = vld [vmem:[#allocation8 + $0x18] sm:$0xff]
    %v110 = vld [vmem:[#allocation8 + $0x20] sm:$0xff]
    %v111 = vld [vmem:[#allocation8 + $0x28] sm:$0xff]
    %v112 = vld [vmem:[#allocation8 + $0x30] sm:$0xff]
    %v113 = vld [vmem:[#allocation8 + $0x38] sm:$0xff]
    %v114 = vld [vmem:[#allocation8 + $0x40] sm:$0xff]
    %v115 = vld [vmem:[#allocation8 + $0x48] sm:$0xff]
    %v116 = vld [vmem:[#allocation8 + $0x50] sm:$0xff]
    %v117 = vld [vmem:[#allocation8 + $0x58] sm:$0xff]
    %v118 = vld [vmem:[#allocation8 + $0x60] sm:$0xff]
    %v119 = vld [vmem:[#allocation8 + $0x68] sm:$0xff]
    %v120 = vld [vmem:[#allocation8 + $0x70] sm:$0xff]
    %v121 = vld [vmem:[#allocation8 + $0x78] sm:$0xff]
    %122 = vmatpush.msra.mxu0 %v121
    %123 = vmatpush.msra.mxu0 %v120
    %124 = vmatpush.msra.mxu0 %v119
    %125 = vmatpush.msra.mxu0 %v118
    %126 = vmatpush.msra.mxu0 %v117
    %127 = vmatpush.msra.mxu0 %v116
    %128 = vmatpush.msra.mxu0 %v115
    %129 = vmatpush.msra.mxu0 %v114
    %130 = vmatpush.msra.mxu0 %v113
    %131 = vmatpush.msra.mxu0 %v112
    %132 = vmatpush.msra.mxu0 %v111
    %133 = vmatpush.msra.mxu0 %v110
    %134 = vmatpush.msra.mxu0 %v109
    %135 = vmatpush.msra.mxu0 %v108
    %136 = vmatpush.msra.mxu0 %v107
    %137 = vmatpush.msra.mxu0 %v106
    %138 = vmatmul.f32.gmra.mxu0 %v104
    %v139 = vpop.f32.mrf.mxu0
    %v140 = vadd.f32 0.0, %v139
    %141 = vdwg.mxu0
    %v142 = vadd.f32 %v105, %v140
    %143 = vst [vmem:[#allocation2] sm:$0xff] %v142
    // Predicated region
    $region38: #{tpu_custom_call.1} parent=1 // pred_check
      %p144 = pneg %p66
    $region39: #{tpu_custom_call.1} parent=1 // pred_check_branch
      %146 = sbr.rel (%p144) target = $region41
    $region40: #{tpu_custom_call.1} parent=1 // pred_region
      %v147 = vld [vmem:[#allocation2] sm:$0xff]
      %v148 = vld [vmem:[%s4] sm:$0x1]
      %v150 = vperm.slane %v148, 0
      %v152 = vadd.f32 %v147, %v150
      %153 = vst [vmem:[#allocation9] sm:$0xff] %v152
    $region41: #{tpu_custom_call.1} parent=1 // pred_fallthru
      _
    // Predicated region
    $region42: #{tpu_custom_call.1} parent=1 // pred_check
      _
    $region43: #{tpu_custom_call.1} parent=1 // pred_check_branch
      %155 = sbr.rel (0) target = $region45
    $region44: #{tpu_custom_call.1} parent=1 // pred_region
      %157 = vsyncadd [#allocation5], 0
      %s159 = sshll.u32 [#allocation9], 4
      %s160 = int_to_ptr.vmem [resolvable:$true] %s159
      %s161 = sshll.u32 %s5, 4
      %s162 = int_to_ptr.hbm [resolvable:$true] %s161
      %164 = dma.vmem_to_hbm [thread:$0]  %s160, 128, %s162, [#allocation5]
    $region45: #{tpu_custom_call.1} parent=1 // pred_fallthru
      _
    // Predicated region
    $region46: #{tpu_custom_call.1} parent=1 // pred_check
      _
    $region47: #{tpu_custom_call.1} parent=1 // pred_check_branch
      %166 = sbr.rel (0) target = $region49
    $region48: #{tpu_custom_call.1} parent=1 // pred_region
      %168 = dma.done [#allocation5], 128
    $region49: #{tpu_custom_call.1} parent=1 // pred_fallthru
      _
    %169 = vsyncpa [#allocation4], 1
    %170 = vsyncpa [#allocation7], 1
    %171 = vsyncpa [#allocation5], 1

</llo_original>
